<compile_context>
chip_gen: v7x
topology: tpu7x:2x2x1
jax: 0.10.0
libtpu: 0.0.40
codegen_flags: <defaults>
</compile_context>

<pallas_src>
import jax
import jax.numpy as jnp
from jax import lax
from jax.experimental import pallas as pl
from jax.experimental.pallas import tpu as pltpu


TILE_DST = 512  # destination-tile width for large graphs (multiple of 128)


def attention_tile_kernel(
    x_aug_ref,    # (N_src, D+1) f32   [x | 1], VMEM-resident across the grid
    xT_tile_ref,  # (D+1, T)     f32   [x | 1]^T, destination tile
    adjT_ref,     # (N_src, T)   int8  adjT[j, i] = 1 iff edge j -> i
    w_row_ref,    # (2, D+1)     f32   rows: [wq^T|bq]*inv_sqrt_c ; [ws^T|bs]
    w_col_ref,    # (D+1, 2)     f32   cols: [wk;bk] , [wv;bv]
    h_ref,        # (1, T)       f32   per-destination TransformerConv output
):
    # --- fused projections (biases folded via the appended ones row/column) ---
    rows = jnp.dot(w_row_ref[...], xT_tile_ref[...],
                   preferred_element_type=jnp.float32)        # (2, T)
    cols = jnp.dot(x_aug_ref[...], w_col_ref[...],
                   preferred_element_type=jnp.float32)        # (N_src, 2)
    q_row = rows[0:1, :]        # (1, T)  already scaled by 1/sqrt(C)
    skip_row = rows[1:2, :]     # (1, T)
    k_col = cols[:, 0:1]        # (N_src, 1)
    v_col = cols[:, 1:2]        # (N_src, 1)

    # --- scores[j, i] = (q_i . k_j)/sqrt(C): rank-1 outer product on the VPU ---
    msk = adjT_ref[...] != 0                                  # bool (N_src, T)
    scores = k_col * q_row                                    # (N_src, T)

    # --- masked softmax over sources j for each target i (column-wise) ---
    neg = jnp.float32(-1e30)
    m = jnp.max(jnp.where(msk, scores, neg), axis=0, keepdims=True)   # (1, T)
    # select (not multiply) so inf in the discarded branch cannot make NaN
    e = jnp.where(msk, jnp.exp(scores - m), jnp.float32(0.0))         # (N_src, T)
    denom = jnp.maximum(jnp.sum(e, axis=0, keepdims=True), jnp.float32(1e-20))
    inv_d = pl.reciprocal(denom, approx=True)                 # EUP
    inv_d = inv_d * (jnp.float32(2.0) - denom * inv_d)        # Newton refine
    # TODO(synk): attention dropout (p=0.2) is a training-only op; inference path has no dropout.

    # --- fused normalization + weighted sum: alpha never materialized ---
    num = jnp.sum(e * v_col, axis=0, keepdims=True)           # (1, T)
    h_ref[...] = (num * inv_d + skip_row).astype(h_ref.dtype)


def finalize_kernel(
    h_ref,     # (1, N) f32
    gn_ref,    # (4,)   f32 SMEM: [gn_weight, gn_bias, gn_mean_scale, 0]
    out_ref,   # (1, N) f32
):
    h = h_ref[...]                                            # (1, N)
    n = h.shape[-1]
    gn_w = gn_ref[0]
    gn_b = gn_ref[1]
    gn_ms = gn_ref[2]

    # --- GraphNorm over the node (lane) axis ---
    inv_n = jnp.float32(1.0 / n)
    mu = jnp.sum(h, axis=1, keepdims=True) * inv_n            # (1, 1)
    hc = h - gn_ms * mu
    var = jnp.sum(hc * hc, axis=1, keepdims=True) * inv_n + jnp.float32(1e-5)
    hn = gn_w * hc / jnp.sqrt(var) + gn_b

    # --- ReLU + global min-max normalization ---
    r = jnp.maximum(hn, jnp.float32(0.0))
    r_min = jnp.min(r, axis=1, keepdims=True)
    r_max = jnp.max(r, axis=1, keepdims=True)
    out_ref[...] = ((r - r_min) / (r_max - r_min + jnp.float32(1e-8))
                    ).astype(out_ref.dtype)


@jax.jit
def dual_graph_learner(x, adj, params):
    """x: (N, in_dim) f32 ; adj: (N, N), adj[i, j] != 0 iff edge j -> i."""
    n, d = x.shape
    c = params["wq"].shape[1]
    if c != 1:
        raise NotImplementedError("kernel specialized for heads * out_dim == 1")
    inv_sqrt_c = 1.0 / (float(c) ** 0.5)
    d_aug = d + 1

    # Fold biases into the matmuls via an appended ones row/column.
    ones_col = jnp.ones((n, 1), jnp.float32)
    x_aug = jnp.concatenate([x.astype(jnp.float32), ones_col], axis=1)   # (N, D+1)
    xT_aug = x_aug.T                                                     # (D+1, N)

    # Fused weight slabs (1/sqrt(C) folded into the q weights/bias).
    w_row = jnp.concatenate(
        [jnp.concatenate([params["wq"].T, params["bq"]], axis=1) * inv_sqrt_c,
         jnp.concatenate([params["ws"].T, params["bs"]], axis=1)],
        axis=0)                                                          # (2, D+1)
    w_col = jnp.concatenate(
        [jnp.concatenate([params["wk"], params["wv"]], axis=1),
         jnp.concatenate([params["bk"], params["bv"]], axis=1)],
        axis=0)                                                          # (D+1, 2)

    # Binary adjacency mask in transposed (src, dst) layout, int8 to cut DMA.
    # Note: TransformerConv semantics are edge / no-edge; edge weights are not used.
    adjT = (adj.T != 0).astype(jnp.int8)                                 # (N_src, N_dst)

    # --- destination-tile grid setup (pad dst axis to a tile multiple) ---
    if n <= TILE_DST:
        tile = n
        n_pad = n
    else:
        tile = TILE_DST
        n_pad = pl.cdiv(n, tile) * tile
    if n_pad != n:
        pad = n_pad - n
        adjT = jnp.pad(adjT, ((0, 0), (0, pad)))      # padded dst cols: no edges
        xT_aug = jnp.pad(xT_aug, ((0, 0), (0, pad)))  # padded dst cols: zeros
    num_tiles = n_pad // tile

    # Explicit VMEM budget: double-buffered adjT/xT/out tiles + resident x_aug
    # + ~4 live f32 (N_src, tile) intermediates (scores / e / selects).
    vmem_est = (2 * n * tile                       # int8 adjT tiles (x2 buffers)
                + 4 * 4 * n * tile                 # f32 N x tile temporaries
                + 2 * 4 * (d_aug + 1) * tile       # xT tile + out tile (x2 buffers)
                + 4 * n * d_aug + (1 << 20))
    vmem_limit = int(min(max(vmem_est, 32 << 20), 96 << 20))
    # TODO(synk): on v7x (64 MiB physical VMEM) shrink TILE_DST if vmem_est nears the budget.

    h_pad = pl.pallas_call(
        attention_tile_kernel,
        out_shape=jax.ShapeDtypeStruct((1, n_pad), jnp.float32),
        grid_spec=pltpu.PrefetchScalarGridSpec(
            num_scalar_prefetch=0,
            grid=(num_tiles,),
            in_specs=[
                pl.BlockSpec((n, d_aug), lambda i: (0, 0)),       # x_aug (resident)
                pl.BlockSpec((d_aug, tile), lambda i: (0, i)),    # xT dst tile
                pl.BlockSpec((n, tile), lambda i: (0, i)),        # adjT dst tile
                pl.BlockSpec((2, d_aug), lambda i: (0, 0)),       # w_row (resident)
                pl.BlockSpec((d_aug, 2), lambda i: (0, 0)),       # w_col (resident)
            ],
            out_specs=pl.BlockSpec((1, tile), lambda i: (0, i)),
        ),
        compiler_params=pltpu.CompilerParams(
            dimension_semantics=("parallel",),
            vmem_limit_bytes=vmem_limit),
    )(x_aug, xT_aug, adjT, w_row, w_col)

    h_row = h_pad[:, :n]                                                 # (1, N)

    # --- finalize: GraphNorm + ReLU + global min-max (needs global stats) ---
    gn = jnp.concatenate(
        [params["gn_w"].reshape(-1), params["gn_b"].reshape(-1),
         params["gn_ms"].reshape(-1), jnp.zeros((1,), jnp.float32)]
    ).astype(jnp.float32)                                                # (4,)

    out_row = pl.pallas_call(
        finalize_kernel,
        out_shape=jax.ShapeDtypeStruct((1, n), jnp.float32),
        in_specs=[pl.BlockSpec(memory_space=pltpu.MemorySpace.VMEM),
                  pl.BlockSpec(memory_space=pltpu.MemorySpace.SMEM)],
        out_specs=pl.BlockSpec(memory_space=pltpu.MemorySpace.VMEM),
    )(h_row, gn)

    return out_row.reshape(n, c)   # lane-dense (1, N) kernel output -> module (N, 1)


def reference_jax(x, adj, p):
    """Pure-JAX reference for the same math (validation only)."""
    q = x @ p["wq"] + p["bq"]
    k = x @ p["wk"] + p["bk"]
    v = x @ p["wv"] + p["bv"]
    skip = x @ p["ws"] + p["bs"]
    c = q.shape[-1]
    scores = (q @ k.T) / jnp.sqrt(jnp.float32(c))
    s = jnp.where(adj > 0.0, scores, -1e30)
    e = jnp.exp(s - jnp.max(s, axis=-1, keepdims=True)) * adj
    alpha = e / (jnp.sum(e, axis=-1, keepdims=True) + 1e-30)
    h = alpha @ v + skip
    mu = jnp.mean(h, axis=0, keepdims=True)
    hc = h - p["gn_ms"] * mu
    var = jnp.mean(hc * hc, axis=0, keepdims=True)
    hn = p["gn_w"] * hc / jnp.sqrt(var + 1e-5) + p["gn_b"]
    r = jnp.maximum(hn, 0.0)
    return (r - jnp.min(r)) / (jnp.max(r) - jnp.min(r) + 1e-8)


def init_params(key, in_dim, out_dim=1, num_heads=1):
    hc = num_heads * out_dim
    ks = jax.random.split(key, 4)
    scale = 1.0 / jnp.sqrt(jnp.float32(in_dim))
    mk = lambda k: (jax.random.normal(k, (in_dim, hc), jnp.float32) * scale)
    return {
        "wq": mk(ks[0]), "wk": mk(ks[1]), "wv": mk(ks[2]), "ws": mk(ks[3]),
        "bq": jnp.zeros((1, hc), jnp.float32),
        "bk": jnp.zeros((1, hc), jnp.float32),
        "bv": jnp.zeros((1, hc), jnp.float32),
        "bs": jnp.zeros((1, hc), jnp.float32),
        "gn_w": jnp.ones((1, hc), jnp.float32),
        "gn_b": jnp.zeros((1, hc), jnp.float32),
        "gn_ms": jnp.ones((1, hc), jnp.float32),
    }


def make_graph(n, offsets):
    """Deterministic directed graph: node i receives edges from (i+off)%n."""
    src = jnp.stack([(jnp.arange(n) + o) % n for o in offsets], axis=1).reshape(-1)
    dst = jnp.repeat(jnp.arange(n), len(offsets))
    adj = jnp.zeros((n, n), jnp.float32).at[dst, src].set(1.0)  # adj[i, j]=1 iff j->i
    return adj


if __name__ == "__main__":
    key = jax.random.PRNGKey(0)
    k_x, k_p, k_x2 = jax.random.split(key, 3)

    # --- small demo graph (single-tile path) ---
    N = 32
    IN_DIM = 8
    OUT_DIM = 1
    HEADS = 1

    x = jax.random.normal(k_x, (N, IN_DIM), jnp.float32)
    adj = make_graph(N, (-1, 1, 5))
    params = init_params(k_p, IN_DIM, OUT_DIM, HEADS)

    out = dual_graph_learner(x, adj, params)
    out = jax.block_until_ready(out)
    ref = reference_jax(x, adj, params)
    assert out.shape == (N, HEADS * OUT_DIM)
    assert jnp.all(jnp.isfinite(out))
    assert jnp.allclose(out, ref, atol=5e-5, rtol=5e-5)

    # --- larger graph exercising the destination-tile grid + padding path ---
    N2 = 600
    x2 = jax.random.normal(k_x2, (N2, IN_DIM), jnp.float32)
    adj2 = make_graph(N2, (-1, 2, 7))
    out2 = dual_graph_learner(x2, adj2, params)
    out2 = jax.block_until_ready(out2)
    ref2 = reference_jax(x2, adj2, params)
    assert out2.shape == (N2, HEADS * OUT_DIM)
    assert jnp.all(jnp.isfinite(out2))
    assert jnp.allclose(out2, ref2, atol=5e-5, rtol=5e-5)

    print("KERNEL_OK")
</pallas_src>

<mosaic_0001>
module attributes {stable_mosaic.version = 11 : i64} {
  func.func @finalize_kernel(%arg0: memref<1x32xf32, #tpu.memory_space<vmem>>, %arg1: memref<4xf32, #tpu.memory_space<smem>>, %arg2: memref<1x32xf32, #tpu.memory_space<vmem>>) attributes {dimension_semantics = [], scalar_prefetch = 0 : i64, scratch_operands = 0 : i64, tpu.core_type = #tpu.core_type<tc>} {
    %c0 = arith.constant 0 : index
    %c0_0 = arith.constant 0 : index
    %0 = vector.load %arg0[%c0, %c0_0] : memref<1x32xf32, #tpu.memory_space<vmem>>, vector<1x32xf32>
    %c0_1 = arith.constant 0 : index
    %1 = memref.load %arg1[%c0_1] : memref<4xf32, #tpu.memory_space<smem>>
    %c1 = arith.constant 1 : index
    %2 = memref.load %arg1[%c1] : memref<4xf32, #tpu.memory_space<smem>>
    %c2 = arith.constant 2 : index
    %3 = memref.load %arg1[%c2] : memref<4xf32, #tpu.memory_space<smem>>
    %cst = arith.constant dense<0.000000e+00> : vector<1xf32>
    %4 = vector.multi_reduction <add>, %0, %cst [1] : vector<1x32xf32> to vector<1xf32>
    %5 = vector.shape_cast %4 : vector<1xf32> to vector<1x1xf32>
    %cst_2 = arith.constant 3.125000e-02 : f32
    %6 = vector.broadcast %cst_2 : f32 to vector<1x1xf32>
    %7 = arith.mulf %5, %6 : vector<1x1xf32>
    %8 = vector.broadcast %3 : f32 to vector<1x1xf32>
    %9 = arith.mulf %8, %7 : vector<1x1xf32>
    %10 = vector.broadcast %9 : vector<1x1xf32> to vector<1x32xf32>
    %11 = arith.subf %0, %10 : vector<1x32xf32>
    %12 = arith.mulf %11, %11 : vector<1x32xf32>
    %cst_3 = arith.constant dense<0.000000e+00> : vector<1xf32>
    %13 = vector.multi_reduction <add>, %12, %cst_3 [1] : vector<1x32xf32> to vector<1xf32>
    %14 = vector.shape_cast %13 : vector<1xf32> to vector<1x1xf32>
    %cst_4 = arith.constant 3.125000e-02 : f32
    %15 = vector.broadcast %cst_4 : f32 to vector<1x1xf32>
    %16 = arith.mulf %14, %15 : vector<1x1xf32>
    %cst_5 = arith.constant 9.99999974E-6 : f32
    %17 = vector.broadcast %cst_5 : f32 to vector<1x1xf32>
    %18 = arith.addf %16, %17 : vector<1x1xf32>
    %19 = vector.broadcast %1 : f32 to vector<1x32xf32>
    %20 = arith.mulf %19, %11 : vector<1x32xf32>
    %21 = math.sqrt %18 : vector<1x1xf32>
    %22 = vector.broadcast %21 : vector<1x1xf32> to vector<1x32xf32>
    %23 = arith.divf %20, %22 : vector<1x32xf32>
    %24 = vector.broadcast %2 : f32 to vector<1x32xf32>
    %25 = arith.addf %23, %24 : vector<1x32xf32>
    %cst_6 = arith.constant 0.000000e+00 : f32
    %26 = vector.broadcast %cst_6 : f32 to vector<1x32xf32>
    %27 = arith.maximumf %25, %26 : vector<1x32xf32>
    %cst_7 = arith.constant dense<0x7F800000> : vector<1xf32>
    %28 = vector.multi_reduction <minimumf>, %27, %cst_7 [1] : vector<1x32xf32> to vector<1xf32>
    %29 = vector.shape_cast %28 : vector<1xf32> to vector<1x1xf32>
    %cst_8 = arith.constant dense<0xFF800000> : vector<1xf32>
    %30 = vector.multi_reduction <maximumf>, %27, %cst_8 [1] : vector<1x32xf32> to vector<1xf32>
    %31 = vector.shape_cast %30 : vector<1xf32> to vector<1x1xf32>
    %32 = vector.broadcast %29 : vector<1x1xf32> to vector<1x32xf32>
    %33 = arith.subf %27, %32 : vector<1x32xf32>
    %34 = arith.subf %31, %29 : vector<1x1xf32>
    %cst_9 = arith.constant 9.99999993E-9 : f32
    %35 = vector.broadcast %cst_9 : f32 to vector<1x1xf32>
    %36 = arith.addf %34, %35 : vector<1x1xf32>
    %37 = vector.broadcast %36 : vector<1x1xf32> to vector<1x32xf32>
    %38 = arith.divf %33, %37 : vector<1x32xf32>
    %c0_10 = arith.constant 0 : index
    %c0_11 = arith.constant 0 : index
    %39 = vector.load %arg2[%c0_10, %c0_11] : memref<1x32xf32, #tpu.memory_space<vmem>>, vector<1x32xf32>
    tpu.vector_store %arg2[%c0_10, %c0_11], %38 {strides = array<i32>} : memref<1x32xf32, #tpu.memory_space<vmem>>, vector<1x32xf32>,
    return
  }
}

module attributes {stable_mosaic.version = 11 : i64} {
  func.func @attention_tile_kernel(%arg0: i32, %arg1: memref<32x9xf32, #tpu.memory_space<vmem>>, %arg2: memref<9x32xf32, #tpu.memory_space<vmem>>, %arg3: memref<32x32xi8, #tpu.memory_space<vmem>>, %arg4: memref<2x9xf32, #tpu.memory_space<vmem>>, %arg5: memref<9x2xf32, #tpu.memory_space<vmem>>, %arg6: memref<1x32xf32, #tpu.memory_space<vmem>>) attributes {dimension_semantics = [#tpu.dimension_semantics<parallel>], iteration_bounds = array<i64: 1>, scalar_prefetch = 0 : i64, scratch_operands = 0 : i64, tpu.core_type = #tpu.core_type<tc>, window_params = [{pipeline_mode = #tpu.pipeline_mode<synchronous>, transform_indices = @transform_0, window_bounds = array<i64: 32, 9>}, {transform_indices = @transform_1, window_bounds = array<i64: 9, 32>}, {transform_indices = @transform_2, window_bounds = array<i64: 32, 32>}, {pipeline_mode = #tpu.pipeline_mode<synchronous>, transform_indices = @transform_3, window_bounds = array<i64: 2, 9>}, {pipeline_mode = #tpu.pipeline_mode<synchronous>, transform_indices = @transform_4, window_bounds = array<i64: 9, 2>}, {transform_indices = @transform_5, window_bounds = array<i64: 1, 32>}]} {
    %c0 = arith.constant 0 : index
    %c0_0 = arith.constant 0 : index
    %0 = vector.load %arg4[%c0, %c0_0] : memref<2x9xf32, #tpu.memory_space<vmem>>, vector<2x9xf32>
    %c0_1 = arith.constant 0 : index
    %c0_2 = arith.constant 0 : index
    %1 = vector.load %arg2[%c0_1, %c0_2] : memref<9x32xf32, #tpu.memory_space<vmem>>, vector<9x32xf32>
    %cst = arith.constant dense<0.000000e+00> : vector<2x32xf32>
    %2 = tpu.matmul %0, %1, %cst {dimension_numbers = #tpu.dot_dimension_numbers<[1], [0], [0], [1], [0, 0, 1, 1], [], []>} : vector<2x9xf32>, vector<9x32xf32>, vector<2x32xf32> -> vector<2x32xf32>
    %c0_3 = arith.constant 0 : index
    %c0_4 = arith.constant 0 : index
    %3 = vector.load %arg1[%c0_3, %c0_4] : memref<32x9xf32, #tpu.memory_space<vmem>>, vector<32x9xf32>
    %c0_5 = arith.constant 0 : index
    %c0_6 = arith.constant 0 : index
    %4 = vector.load %arg5[%c0_5, %c0_6] : memref<9x2xf32, #tpu.memory_space<vmem>>, vector<9x2xf32>
    %cst_7 = arith.constant dense<0.000000e+00> : vector<32x2xf32>
    %5 = tpu.matmul %3, %4, %cst_7 {dimension_numbers = #tpu.dot_dimension_numbers<[1], [0], [0], [1], [0, 0, 1, 1], [], []>} : vector<32x9xf32>, vector<9x2xf32>, vector<32x2xf32> -> vector<32x2xf32>
    %6 = vector.extract_strided_slice %2 {offsets = [0, 0], sizes = [1, 32], strides = [1, 1]} : vector<2x32xf32> to vector<1x32xf32>
    %7 = vector.extract_strided_slice %2 {offsets = [1, 0], sizes = [1, 32], strides = [1, 1]} : vector<2x32xf32> to vector<1x32xf32>
    %8 = vector.extract_strided_slice %5 {offsets = [0, 0], sizes = [32, 1], strides = [1, 1]} : vector<32x2xf32> to vector<32x1xf32>
    %9 = vector.extract_strided_slice %5 {offsets = [0, 1], sizes = [32, 1], strides = [1, 1]} : vector<32x2xf32> to vector<32x1xf32>
    %c0_8 = arith.constant 0 : index
    %c0_9 = arith.constant 0 : index
    %10 = vector.load %arg3[%c0_8, %c0_9] : memref<32x32xi8, #tpu.memory_space<vmem>>, vector<32x32xi8>
    %c0_i8 = arith.constant 0 : i8
    %11 = vector.broadcast %c0_i8 : i8 to vector<32x32xi8>
    %12 = arith.cmpi ne, %10, %11 : vector<32x32xi8>
    %13 = vector.broadcast %8 : vector<32x1xf32> to vector<32x32xf32>
    %14 = vector.broadcast %6 : vector<1x32xf32> to vector<32x32xf32>
    %15 = arith.mulf %13, %14 : vector<32x32xf32>
    %cst_10 = arith.constant -1.000000e+30 : f32
    %16 = vector.broadcast %cst_10 : f32 to vector<32x32xf32>
    %17 = arith.select %12, %15, %16 : vector<32x32xi1>, vector<32x32xf32>
    %cst_11 = arith.constant dense<0xFF800000> : vector<32xf32>
    %18 = vector.multi_reduction <maximumf>, %17, %cst_11 [0] : vector<32x32xf32> to vector<32xf32>
    %19 = vector.shape_cast %18 : vector<32xf32> to vector<1x32xf32>
    %20 = vector.broadcast %19 : vector<1x32xf32> to vector<32x32xf32>
    %21 = arith.subf %15, %20 : vector<32x32xf32>
    %22 = math.exp %21 : vector<32x32xf32>
    %cst_12 = arith.constant 0.000000e+00 : f32
    %23 = vector.broadcast %cst_12 : f32 to vector<32x32xf32>
    %24 = arith.select %12, %22, %23 : vector<32x32xi1>, vector<32x32xf32>
    %cst_13 = arith.constant dense<0.000000e+00> : vector<32xf32>
    %25 = vector.multi_reduction <add>, %24, %cst_13 [0] : vector<32x32xf32> to vector<32xf32>
    %26 = vector.shape_cast %25 : vector<32xf32> to vector<1x32xf32>
    %cst_14 = arith.constant 9.99999968E-21 : f32
    %27 = vector.broadcast %cst_14 : f32 to vector<1x32xf32>
    %28 = arith.maximumf %26, %27 : vector<1x32xf32>
    %29 = tpu.reciprocal %28 {approx = true} : vector<1x32xf32> -> vector<1x32xf32>
    %30 = arith.mulf %28, %29 : vector<1x32xf32>
    %cst_15 = arith.constant 2.000000e+00 : f32
    %31 = vector.broadcast %cst_15 : f32 to vector<1x32xf32>
    %32 = arith.subf %31, %30 : vector<1x32xf32>
    %33 = arith.mulf %29, %32 : vector<1x32xf32>
    %34 = vector.broadcast %9 : vector<32x1xf32> to vector<32x32xf32>
    %35 = arith.mulf %24, %34 : vector<32x32xf32>
    %cst_16 = arith.constant dense<0.000000e+00> : vector<32xf32>
    %36 = vector.multi_reduction <add>, %35, %cst_16 [0] : vector<32x32xf32> to vector<32xf32>
    %37 = vector.shape_cast %36 : vector<32xf32> to vector<1x32xf32>
    %38 = arith.mulf %37, %33 : vector<1x32xf32>
    %39 = arith.addf %38, %7 : vector<1x32xf32>
    %c0_17 = arith.constant 0 : index
    %c0_18 = arith.constant 0 : index
    %40 = vector.load %arg6[%c0_17, %c0_18] : memref<1x32xf32, #tpu.memory_space<vmem>>, vector<1x32xf32>
    tpu.vector_store %arg6[%c0_17, %c0_18], %39 {strides = array<i32>} : memref<1x32xf32, #tpu.memory_space<vmem>>, vector<1x32xf32>,
    return
  }
  func.func @transform_0(%arg0: i32) -> (i32, i32) {
    %c0_i32 = arith.constant 0 : i32
    %c0_i32_0 = arith.constant 0 : i32
    %c0_i32_1 = arith.constant 0 : i32
    return %c0_i32, %c0_i32_0 : i32, i32
  }
  func.func @transform_1(%arg0: i32) -> (i32, i32) {
    %c0_i32 = arith.constant 0 : i32
    %c0_i32_0 = arith.constant 0 : i32
    return %c0_i32, %arg0 : i32, i32
  }
  func.func @transform_2(%arg0: i32) -> (i32, i32) {
    %c0_i32 = arith.constant 0 : i32
    %c0_i32_0 = arith.constant 0 : i32
    return %c0_i32, %arg0 : i32, i32
  }
  func.func @transform_3(%arg0: i32) -> (i32, i32) {
    %c0_i32 = arith.constant 0 : i32
    %c0_i32_0 = arith.constant 0 : i32
    %c0_i32_1 = arith.constant 0 : i32
    return %c0_i32, %c0_i32_0 : i32, i32
  }
  func.func @transform_4(%arg0: i32) -> (i32, i32) {
    %c0_i32 = arith.constant 0 : i32
    %c0_i32_0 = arith.constant 0 : i32
    %c0_i32_1 = arith.constant 0 : i32
    return %c0_i32, %c0_i32_0 : i32, i32
  }
  func.func @transform_5(%arg0: i32) -> (i32, i32) {
    %c0_i32 = arith.constant 0 : i32
    %c0_i32_0 = arith.constant 0 : i32
    return %c0_i32, %arg0 : i32, i32
  }
}

</mosaic_0001>

<llo_original>
// kernel: dual_graph_learner.3
$region0: #{dual_graph_learner.3}
  #allocation0 [shape = 'u32[]', space=smem, size = 0x4, offset = 0x4, fixed_abs, tag = 'smem constant byte address 0x4 - core index']
  #allocation1 [shape = 'u32[144,128]{1,0:T(1,128)}', space=vmem, size = 0x12000, scoped, tag = 'internal scratch']
  %s0 = inlined_call_operand.vmem [shape: f32[1,32], index: 0, kind: input, shape index: {}]
  %s1 = inlined_call_operand.vmem [shape: f32[4], index: 1, kind: input, shape index: {}]
  %s2 = inlined_call_operand.hbm [shape: f32[1,32], index: 2, kind: output, shape index: {}]
  %s3 = sld [smem:[#allocation0]]
  $region22: #{dual_graph_learner.3} parent=0
    _
  %s5 = ssub.s32 1, %s3
  %s6 = scalar_select 0, %s5, %s3
  $region1: #{dual_graph_learner.3} parent=0
    #allocation2 [shape = 'u8[512]{0}', space=smem, size = 0x200, scoped, tag = 'input window, operand 1, single buffered']
    #allocation3 [shape = 's32[1]{0}', space=sflag, size = 0x4, scoped, tag = 'scoped memory for dual_graph_learner.3']
    #allocation4 [shape = 's32[1]{0}', space=sflag, size = 0x4, scoped, tag = 'scoped memory for dual_graph_learner.3']
    #allocation5 [shape = 'u8[512]{0}', space=vmem, size = 0x400, scoped, tag = 'output window, operand 0, single buffered']
    %7 = vsyncpa [#allocation4], 0
    %8 = vsyncpa [#allocation3], 0
    // Predicated region
    $region2: #{dual_graph_learner.3} parent=1 // pred_check
      _
    $region3: #{dual_graph_learner.3} parent=1 // pred_check_branch
      %10 = sbr.rel (0) target = $region5
    $region4: #{dual_graph_learner.3} parent=1 // pred_region
      _
    $region5: #{dual_graph_learner.3} parent=1 // pred_fallthru
      _
    // Predicated region
    $region6: #{dual_graph_learner.3} parent=1 // pred_check
      _
    $region7: #{dual_graph_learner.3} parent=1 // pred_check_branch
      %12 = sbr.rel (0) target = $region9
    $region8: #{dual_graph_learner.3} parent=1 // pred_region
      %s14 = ssub.s32 16, 16
      %15 = vsyncadd [#allocation4], %s14
      %s17 = sshll.u32 %s1, 4
      %s18 = int_to_ptr.vmem [resolvable:$true] %s17
      %20 = dma.vmem_to_smem %s18, 16, [#allocation2], [#allocation4]
    $region9: #{dual_graph_learner.3} parent=1 // pred_fallthru
      _
    // Predicated region
    $region10: #{dual_graph_learner.3} parent=1 // pred_check
      _
    $region11: #{dual_graph_learner.3} parent=1 // pred_check_branch
      %22 = sbr.rel (0) target = $region13
    $region12: #{dual_graph_learner.3} parent=1 // pred_region
      %23 = dma.done [#allocation4], 16
    $region13: #{dual_graph_learner.3} parent=1 // pred_fallthru
      _
    %24 = sfence
    %v25 = vld [vmem:[%s0] sm:$0x1]
    %s26 = sld [smem:[#allocation2]]
    %s27 = sld [smem:[#allocation2 + $0x1]]
    %s28 = sld [smem:[#allocation2 + $0x2]]
    %vm29 = vcmask 253952
    %v30 = vsel %vm29, %v25, 0.0
    %31 = vadd.xlane.f32.xlu0 %v30
    %v32 = vpop.xlane.xlu0 %31
    %v33 = vmul.f32 %v32, 0.03125
    %v34 = vstv %s28
    %v35 = vmul.f32 %v34, %v33
    %v36 = vsub.f32 %v25, %v35
    %v37 = vmul.f32 %v36, %v36
    %v38 = vsel %vm29, %v37, 0.0
    %39 = vadd.xlane.f32.xlu0 %v38
    %v40 = vpop.xlane.xlu0 %39
    %v41 = vmul.f32 %v40, 0.03125
    %v42 = vadd.f32 %v41, 1e-05
    %v43 = vstv %s26
    %v44 = vmul.f32 %v43, %v36
    %v45 = vrsqrt.pop %v42
    %v46 = vmul.f32 %v42, %v45
    %vm47 = vcmp.eq.f32.partialorder %v42, inf
    %v48 = vsel %vm47, %v42, %v46
    %vm49 = vcmp.eq.f32.partialorder %v42, 0.0
    %v50 = vand.u32 %v42, 2147483648
    %v51 = vsel %vm49, %v50, %v48
    %v52 = vrcp.pop %v51
    %v53 = vmul.f32 %v44, %v52
    %v54 = vstv %s27
    %v55 = vadd.f32 %v53, %v54
    %v56 = vmax.f32 %v55, 0.0
    %v57 = vsel %vm29, %v56, inf
    %58 = vmin.xlane.f32.xlu0 %v57
    %v59 = vpop.xlane.xlu0 %58
    %v60 = vsel %vm29, %v56, -inf
    %61 = vmax.xlane.f32.xlu0 %v60
    %v62 = vpop.xlane.xlu0 %61
    %v63 = vsub.f32 %v56, %v59
    %v64 = vsub.f32 %v62, %v59
    %v65 = vadd.f32 %v64, 1e-08
    %v66 = vrcp.pop %v65
    %v67 = vmul.f32 %v63, %v66
    %68 = vst.msk [vmem:[#allocation5] sm:$0x1] %vm29, %v67
    // Predicated region
    $region14: #{dual_graph_learner.3} parent=1 // pred_check
      _
    $region15: #{dual_graph_learner.3} parent=1 // pred_check_branch
      %70 = sbr.rel (0) target = $region17
    $region16: #{dual_graph_learner.3} parent=1 // pred_region
      %s72 = ssub.s32 16, 16
      %73 = vsyncadd [#allocation3], %s72
      %s75 = sshll.u32 [#allocation5], 4
      %s76 = int_to_ptr.vmem [resolvable:$true] %s75
      %78 = dma.vmem_to_hbm [thread:$0]  %s76, 16, %s2, [#allocation3]
    $region17: #{dual_graph_learner.3} parent=1 // pred_fallthru
      _
    // Predicated region
    $region18: #{dual_graph_learner.3} parent=1 // pred_check
      _
    $region19: #{dual_graph_learner.3} parent=1 // pred_check_branch
      %80 = sbr.rel (0) target = $region21
    $region20: #{dual_graph_learner.3} parent=1 // pred_region
      %81 = dma.done [#allocation3], 16
    $region21: #{dual_graph_learner.3} parent=1 // pred_fallthru
      _
    %82 = vsyncpa [#allocation3], 1
    %83 = vsyncpa [#allocation4], 1

// kernel: dual_graph_learner.2
$region0: #{dual_graph_learner.2}
  #allocation0 [shape = 'u32[]', space=smem, size = 0x4, offset = 0x4, fixed_abs, tag = 'smem constant byte address 0x4 - core index']
  #allocation1 [shape = 'u32[144,128]{1,0:T(1,128)}', space=vmem, size = 0x12000, scoped, tag = 'internal scratch']
  %s0 = inlined_call_operand.vmem [shape: f32[32,9], index: 0, kind: input, shape index: {}]
  %s1 = inlined_call_operand.vmem [shape: f32[9,32], index: 1, kind: input, shape index: {}]
  %s2 = inlined_call_operand.vmem [shape: s8[32,32], index: 2, kind: input, shape index: {}]
  %s3 = inlined_call_operand.vmem [shape: f32[2,9], index: 3, kind: input, shape index: {}]
  %s4 = inlined_call_operand.vmem [shape: f32[9,2], index: 4, kind: input, shape index: {}]
  %s5 = inlined_call_operand.vmem [shape: f32[1,32], index: 5, kind: output, shape index: {}]
  %s6 = sld [smem:[#allocation0]]
  $region30: #{dual_graph_learner.2} parent=0
    _
  %s8 = ssub.s32 1, %s6
  %s9 = scalar_select 0, %s8, %s6
  // Predicated region
  $region2: #{dual_graph_learner.2} parent=0 // pred_check
    _
  $region3: #{dual_graph_learner.2} parent=0 // pred_check_branch
    %11 = sbr.rel (0) target = $region5
  $region4: #{dual_graph_learner.2} parent=0 // pred_region
    _
  $region5: #{dual_graph_learner.2} parent=0 // pred_fallthru
    _
  // Predicated region
  $region6: #{dual_graph_learner.2} parent=0 // pred_check
    _
  $region7: #{dual_graph_learner.2} parent=0 // pred_check_branch
    %13 = sbr.rel (0) target = $region9
  $region8: #{dual_graph_learner.2} parent=0 // pred_region
    _
  $region9: #{dual_graph_learner.2} parent=0 // pred_fallthru
    _
  // Predicated region
  $region10: #{dual_graph_learner.2} parent=0 // pred_check
    _
  $region11: #{dual_graph_learner.2} parent=0 // pred_check_branch
    %15 = sbr.rel (0) target = $region13
  $region12: #{dual_graph_learner.2} parent=0 // pred_region
    _
  $region13: #{dual_graph_learner.2} parent=0 // pred_fallthru
    _
  // Predicated region
  $region14: #{dual_graph_learner.2} parent=0 // pred_check
    _
  $region15: #{dual_graph_learner.2} parent=0 // pred_check_branch
    %17 = sbr.rel (0) target = $region17
  $region16: #{dual_graph_learner.2} parent=0 // pred_region
    _
  $region17: #{dual_graph_learner.2} parent=0 // pred_fallthru
    _
  // Predicated region
  $region18: #{dual_graph_learner.2} parent=0 // pred_check
    _
  $region19: #{dual_graph_learner.2} parent=0 // pred_check_branch
    %19 = sbr.rel (0) target = $region21
  $region20: #{dual_graph_learner.2} parent=0 // pred_region
    _
  $region21: #{dual_graph_learner.2} parent=0 // pred_fallthru
    _
  %v22 = vld [vmem:[%s3] sm:$0x3]
  %v23 = vld [vmem:[%s1] sm:$0xff]
  %v24 = vld [vmem:[%s1 + $0x8] sm:$0x1]
  %vm25 = vcmask 72704
  %v27 = vsel %vm25, %v22, 0
  %vm29 = vcmask 1040384
  %v31 = vsel %vm29, %v24, 0
  %33 = vmatprep.subr.mxu0 0.0
  %34 = vmatpush1.msra.mxu0 %v23
  %35 = vmatprep.subr.mxu0 0.0
  %36 = vmatpush1.msra.mxu0 %v31
  %37 = vmatprep.subr.mxu0 0.0
  %38 = vmatpush1.msra.mxu0 0.0
  %39 = vmatprep.subr.mxu0 0.0
  %40 = vmatpush1.msra.mxu0 0.0
  %41 = vmatprep.subr.mxu0 0.0
  %42 = vmatpush1.msra.mxu0 0.0
  %43 = vmatprep.subr.mxu0 0.0
  %44 = vmatpush1.msra.mxu0 0.0
  %45 = vmatprep.subr.mxu0 0.0
  %46 = vmatpush1.msra.mxu0 0.0
  %47 = vmatprep.subr.mxu0 0.0
  %48 = vmatpush1.msra.mxu0 0.0
  %49 = vmatprep.subr.mxu0 0.0
  %50 = vmatpush1.msra.mxu0 0.0
  %51 = vmatprep.subr.mxu0 0.0
  %52 = vmatpush1.msra.mxu0 0.0
  %53 = vmatprep.subr.mxu0 0.0
  %54 = vmatpush1.msra.mxu0 0.0
  %55 = vmatprep.subr.mxu0 0.0
  %56 = vmatpush1.msra.mxu0 0.0
  %57 = vmatprep.subr.mxu0 0.0
  %58 = vmatpush1.msra.mxu0 0.0
  %59 = vmatprep.subr.mxu0 0.0
  %60 = vmatpush1.msra.mxu0 0.0
  %61 = vmatprep.subr.mxu0 0.0
  %62 = vmatpush1.msra.mxu0 0.0
  %63 = vmatprep.subr.mxu0 0.0
  %64 = vmatpush1.msra.mxu0 0.0
  %65 = vmatprep.subr.mxu0 0.0
  %66 = vmatpush1.msra.mxu0 0.0
  %67 = vmatprep.subr.mxu0 0.0
  %68 = vmatpush1.msra.mxu0 0.0
  %69 = vmatprep.subr.mxu0 0.0
  %70 = vmatpush1.msra.mxu0 0.0
  %71 = vmatprep.subr.mxu0 0.0
  %72 = vmatpush1.msra.mxu0 0.0
  %73 = vmatprep.subr.mxu0 0.0
  %74 = vmatpush1.msra.mxu0 0.0
  %75 = vmatprep.subr.mxu0 0.0
  %76 = vmatpush1.msra.mxu0 0.0
  %77 = vmatprep.subr.mxu0 0.0
  %78 = vmatpush1.msra.mxu0 0.0
  %79 = vmatprep.subr.mxu0 0.0
  %80 = vmatpush1.msra.mxu0 0.0
  %81 = vmatprep.subr.mxu0 0.0
  %82 = vmatpush1.msra.mxu0 0.0
  %83 = vmatprep.subr.mxu0 0.0
  %84 = vmatpush1.msra.mxu0 0.0
  %85 = vmatprep.subr.mxu0 0.0
  %86 = vmatpush1.msra.mxu0 0.0
  %87 = vmatprep.subr.mxu0 0.0
  %88 = vmatpush1.msra.mxu0 0.0
  %89 = vmatprep.subr.mxu0 0.0
  %90 = vmatpush1.msra.mxu0 0.0
  %91 = vmatprep.subr.mxu0 0.0
  %92 = vmatpush1.msra.mxu0 0.0
  %93 = vmatprep.subr.mxu0 0.0
  %94 = vmatpush1.msra.mxu0 0.0
  %95 = vmatprep.subr.mxu0 0.0
  %96 = vmatpush1.msra.mxu0 0.0
  %97 = vmatprep.mubr.f32.mxu0 0.0
  %98 = vmatmul.mubr.f32.gmra.mrb[0].mxu0 %v27
  %v99 = vpop.f32.mrb[0].mxu0
  %v100 = vadd.f32 0.0, %v99
  %v101 = vpop.f32.mrb[0].mxu0
  %102 = vdwg.mxu0
  %v103 = vld [vmem:[%s0] sm:$0xff]
  %v104 = vld [vmem:[%s0 + $0x8] sm:$0xff]
  %v105 = vld [vmem:[%s0 + $0x10] sm:$0xff]
  %v106 = vld [vmem:[%s0 + $0x18] sm:$0xff]
  %v107 = vld [vmem:[%s4] sm:$0xff]
  %v108 = vld [vmem:[%s4 + $0x8] sm:$0x1]
  %v110 = vsel %vm25, %v103, 0
  %v113 = vsel %vm25, %v104, 0
  %v116 = vsel %vm25, %v105, 0
  %v119 = vsel %vm25, %v106, 0
  %v122 = vsel %vm29, %v108, 0
  %124 = vmatprep.subr.mxu0 0.0
  %125 = vmatpush1.msra.mxu0 %v107
  %126 = vmatprep.subr.mxu0 0.0
  %127 = vmatpush1.msra.mxu0 %v122
  %128 = vmatprep.subr.mxu0 0.0
  %129 = vmatpush1.msra.mxu0 0.0
  %130 = vmatprep.subr.mxu0 0.0
  %131 = vmatpush1.msra.mxu0 0.0
  %132 = vmatprep.subr.mxu0 0.0
  %133 = vmatpush1.msra.mxu0 0.0
  %134 = vmatprep.subr.mxu0 0.0
  %135 = vmatpush1.msra.mxu0 0.0
  %136 = vmatprep.subr.mxu0 0.0
  %137 = vmatpush1.msra.mxu0 0.0
  %138 = vmatprep.subr.mxu0 0.0
  %139 = vmatpush1.msra.mxu0 0.0
  %140 = vmatprep.subr.mxu0 0.0
  %141 = vmatpush1.msra.mxu0 0.0
  %142 = vmatprep.subr.mxu0 0.0
  %143 = vmatpush1.msra.mxu0 0.0
  %144 = vmatprep.subr.mxu0 0.0
  %145 = vmatpush1.msra.mxu0 0.0
  %146 = vmatprep.subr.mxu0 0.0
  %147 = vmatpush1.msra.mxu0 0.0
  %148 = vmatprep.subr.mxu0 0.0
  %149 = vmatpush1.msra.mxu0 0.0
  %150 = vmatprep.subr.mxu0 0.0
  %151 = vmatpush1.msra.mxu0 0.0
  %152 = vmatprep.subr.mxu0 0.0
  %153 = vmatpush1.msra.mxu0 0.0
  %154 = vmatprep.subr.mxu0 0.0
  %155 = vmatpush1.msra.mxu0 0.0
  %156 = vmatprep.subr.mxu0 0.0
  %157 = vmatpush1.msra.mxu0 0.0
  %158 = vmatprep.subr.mxu0 0.0
  %159 = vmatpush1.msra.mxu0 0.0
  %160 = vmatprep.subr.mxu0 0.0
  %161 = vmatpush1.msra.mxu0 0.0
  %162 = vmatprep.subr.mxu0 0.0
  %163 = vmatpush1.msra.mxu0 0.0
  %164 = vmatprep.subr.mxu0 0.0
  %165 = vmatpush1.msra.mxu0 0.0
  %166 = vmatprep.subr.mxu0 0.0
  %167 = vmatpush1.msra.mxu0 0.0
  %168 = vmatprep.subr.mxu0 0.0
  %169 = vmatpush1.msra.mxu0 0.0
  %170 = vmatprep.subr.mxu0 0.0
  %171 = vmatpush1.msra.mxu0 0.0
  %172 = vmatprep.subr.mxu0 0.0
  %173 = vmatpush1.msra.mxu0 0.0
  %174 = vmatprep.subr.mxu0 0.0
  %175 = vmatpush1.msra.mxu0 0.0
  %176 = vmatprep.subr.mxu0 0.0
  %177 = vmatpush1.msra.mxu0 0.0
  %178 = vmatprep.subr.mxu0 0.0
  %179 = vmatpush1.msra.mxu0 0.0
  %180 = vmatprep.subr.mxu0 0.0
  %181 = vmatpush1.msra.mxu0 0.0
  %182 = vmatprep.subr.mxu0 0.0
  %183 = vmatpush1.msra.mxu0 0.0
  %184 = vmatprep.subr.mxu0 0.0
  %185 = vmatpush1.msra.mxu0 0.0
  %186 = vmatprep.subr.mxu0 0.0
  %187 = vmatpush1.msra.mxu0 0.0
  %188 = vmatprep.mubr.f32.mxu0 0.0
  %189 = vmatmul.mubr.f32.gmra.mrb[0].mxu0 %v110
  %v190 = vpop.f32.mrb[0].mxu0
  %v191 = vadd.f32 0.0, %v190
  %v192 = vpop.f32.mrb[0].mxu0
  %193 = vmatprep.mubr.f32.mxu0 0.0
  %194 = vmatmul.mubr.f32.gmra.mrb[0].mxu0 %v113
  %v195 = vpop.f32.mrb[0].mxu0
  %v196 = vadd.f32 0.0, %v195
  %v197 = vpop.f32.mrb[0].mxu0
  %198 = vmatprep.mubr.f32.mxu0 0.0
  %199 = vmatmul.mubr.f32.gmra.mrb[0].mxu0 %v116
  %v200 = vpop.f32.mrb[0].mxu0
  %v201 = vadd.f32 0.0, %v200
  %v202 = vpop.f32.mrb[0].mxu0
  %203 = vmatprep.mubr.f32.mxu0 0.0
  %204 = vmatmul.mubr.f32.gmra.mrb[0].mxu0 %v119
  %v205 = vpop.f32.mrb[0].mxu0
  %v206 = vadd.f32 0.0, %v205
  %v207 = vpop.f32.mrb[0].mxu0
  %208 = vdwg.mxu0
  %v209 = vld [vmem:[%s2] sm:$0xff]
  %vm210 = vnez %v209
  %212 = vset.pattern.permute.xlu0 0
  %213 = vperm.xlu0 %212, %v191
  %v214 = vpop.permute.xlu0 %213
  %217 = vset.pattern.permute.xlu0 0
  %218 = vperm.xlu0 %217, %v196
  %v219 = vpop.permute.xlu0 %218
  %222 = vset.pattern.permute.xlu0 0
  %223 = vperm.xlu0 %222, %v201
  %v224 = vpop.permute.xlu0 %223
  %227 = vset.pattern.permute.xlu0 0
  %228 = vperm.xlu0 %227, %v206
  %v229 = vpop.permute.xlu0 %228
  %v231 = vlaneseq
  %v232 = vshrl.u32 %v231, 7
  %v233 = vsub.s32 0, %v232
  %v234 = vrot.slane %v100, %v233
  %v235 = vmul.f32 %v214, %v234
  %v236 = vmul.f32 %v219, %v234
  %v237 = vmul.f32 %v224, %v234
  %v238 = vmul.f32 %v229, %v234
  %v239 = vsel %vm210, 16843009, 0
  %v240 = vunpack.c.0.s8 %v239
  %v241 = vunpack.c.1.s8 %v239
  %v242 = vunpack.c.2.s8 %v239
  %v243 = vunpack.c.3.s8 %v239
  %v244 = vpack.c.b16 %v240, %v240
  %v245 = vpack.c.b8 %v244, %v244
  %v246 = vpack.c.b16 %v241, %v241
  %v247 = vpack.c.b8 %v246, %v246
  %v248 = vpack.c.b16 %v242, %v242
  %v249 = vpack.c.b8 %v248, %v248
  %v250 = vpack.c.b16 %v243, %v243
  %v251 = vpack.c.b8 %v250, %v250
  %vm252 = vnez %v245
  %vm253 = vnez %v247
  %vm254 = vnez %v249
  %vm255 = vnez %v251
  %v256 = vsel %vm252, 16843009, 0
  %v257 = vsel %vm253, 16843009, 0
  %v258 = vsel %vm254, 16843009, 0
  %v259 = vsel %vm255, 16843009, 0
  %v260 = vunpack.c.0.s8 %v256
  %v261 = vunpack.c.0.s8 %v257
  %v262 = vunpack.c.0.s8 %v258
  %v263 = vunpack.c.0.s8 %v259
  %vm264 = vcmp.ne.s32.totalorder %v260, 0
  %vm265 = vcmp.ne.s32.totalorder %v261, 0
  %vm266 = vcmp.ne.s32.totalorder %v262, 0
  %vm267 = vcmp.ne.s32.totalorder %v263, 0
  %v268 = vsel %vm264, %v235, -1e+30
  %v269 = vsel %vm265, %v236, -1e+30
  %v270 = vsel %vm266, %v237, -1e+30
  %v271 = vsel %vm267, %v238, -1e+30
  %vm272 = vcmask 261120
  %v273 = vsel %vm272, %v268, -inf
  %v274 = vsel %vm272, %v269, -inf
  %v275 = vsel %vm272, %v270, -inf
  %v276 = vsel %vm272, %v271, -inf
  %v277 = vmax.f32 %v273, %v274
  %v278 = vmax.f32 %v275, %v276
  %v279 = vmax.f32 %v277, %v278
  %v280 = vrot.slane %v279, 4
  %v281 = vmax.f32 %v279, %v280
  %v282 = vrot.slane %v281, 2
  %v283 = vmax.f32 %v281, %v282
  %v284 = vrot.slane %v283, 1
  %v285 = vmax.f32 %v283, %v284
  %v286 = vsub.f32 %v235, %v285
  %v287 = vsub.f32 %v236, %v285
  %v288 = vsub.f32 %v237, %v285
  %v289 = vsub.f32 %v238, %v285
  %v290 = vmul.f32 %v286, 1.442695
  %v291 = vpow.pop %v290
  %v292 = vmul.f32 %v287, 1.442695
  %v293 = vpow.pop %v292
  %v294 = vmul.f32 %v288, 1.442695
  %v295 = vpow.pop %v294
  %v296 = vmul.f32 %v289, 1.442695
  %v297 = vpow.pop %v296
  %v298 = vsel %vm264, %v291, 0.0
  %v299 = vsel %vm265, %v293, 0.0
  %v300 = vsel %vm266, %v295, 0.0
  %v301 = vsel %vm267, %v297, 0.0
  %v302 = vsel %vm272, %v298, 0.0
  %v303 = vsel %vm272, %v299, 0.0
  %v304 = vadd.f32 %v302, %v303
  %v305 = vsel %vm272, %v300, 0.0
  %v306 = vadd.f32 %v304, %v305
  %v307 = vsel %vm272, %v301, 0.0
  %v308 = vadd.f32 %v306, %v307
  %v309 = vrot.slane %v308, 4
  %v310 = vadd.f32 %v308, %v309
  %v311 = vrot.slane %v310, 2
  %v312 = vadd.f32 %v310, %v311
  %v313 = vrot.slane %v312, 1
  %v314 = vadd.f32 %v312, %v313
  %v315 = vmax.f32 %v314, 1e-20
  %v316 = vrcp.pop %v315
  %v317 = vmul.f32 %v315, %v316
  %v318 = vsub.f32 2.0, %v317
  %v319 = vmul.f32 %v316, %v318
  %320 = vset.pattern.permute.xlu0 1
  %321 = vperm.xlu0 %320, %v191
  %v322 = vpop.permute.xlu0 %321
  %324 = vset.pattern.permute.xlu0 1
  %325 = vperm.xlu0 %324, %v196
  %v326 = vpop.permute.xlu0 %325
  %328 = vset.pattern.permute.xlu0 1
  %329 = vperm.xlu0 %328, %v201
  %v330 = vpop.permute.xlu0 %329
  %332 = vset.pattern.permute.xlu0 1
  %333 = vperm.xlu0 %332, %v206
  %v334 = vpop.permute.xlu0 %333
  %v336 = vmul.f32 %v298, %v322
  %v337 = vmul.f32 %v299, %v326
  %v338 = vmul.f32 %v300, %v330
  %v339 = vmul.f32 %v301, %v334
  %v340 = vsel %vm272, %v336, 0.0
  %v341 = vsel %vm272, %v337, 0.0
  %v342 = vadd.f32 %v340, %v341
  %v343 = vsel %vm272, %v338, 0.0
  %v344 = vadd.f32 %v342, %v343
  %v345 = vsel %vm272, %v339, 0.0
  %v346 = vadd.f32 %v344, %v345
  %v347 = vrot.slane %v346, 4
  %v348 = vadd.f32 %v346, %v347
  %v349 = vrot.slane %v348, 2
  %v350 = vadd.f32 %v348, %v349
  %v351 = vrot.slane %v350, 1
  %v352 = vadd.f32 %v350, %v351
  %v353 = vmul.f32 %v352, %v319
  %v354 = vadd.f32 %v353, %v100
  %vm355 = vcmask 254977
  %356 = vst.msk [vmem:[%s5 - $0x1] sm:$0x2] %vm355, %v354
  // Predicated region
  $region22: #{dual_graph_learner.2} parent=0 // pred_check
    _
  $region23: #{dual_graph_learner.2} parent=0 // pred_check_branch
    %358 = sbr.rel (0) target = $region25
  $region24: #{dual_graph_learner.2} parent=0 // pred_region
    _
  $region25: #{dual_graph_learner.2} parent=0 // pred_fallthru
    _
  // Predicated region
  $region26: #{dual_graph_learner.2} parent=0 // pred_check
    _
  $region27: #{dual_graph_learner.2} parent=0 // pred_check_branch
    %360 = sbr.rel (0) target = $region29
  $region28: #{dual_graph_learner.2} parent=0 // pred_region
    _
  $region29: #{dual_graph_learner.2} parent=0 // pred_fallthru
    _

</llo_original>
